<compile_context>
chip_gen: v7x
topology: tpu7x:2x2x1
jax: 0.10.0
libtpu: 0.0.40
codegen_flags: <defaults>
</compile_context>

<pallas_src>
import functools
import math

import jax
import jax.numpy as jnp
from jax.experimental import pallas as pl
from jax.experimental.pallas import tpu as pltpu

_SOFTPLUS_INV_1 = math.log(math.expm1(1.0))  # bias of torchrl's "biased_softplus_1.0"
_SCALE_LB = 1e-4
_IN_DIM, _IN_PAD, _HID, _OUT = 27, 32, 64, 16


def _h1_kernel(x_ref, w1_ref, b1_ref, h1_ref):
    # h1 = x @ W1^T + b1, emitted in bf16 for the MXU stages downstream.
    h1 = jnp.dot(x_ref[...], w1_ref[...], preferred_element_type=jnp.float32)
    h1_ref[...] = (h1 + b1_ref[...]).astype(jnp.bfloat16)


def _actor_kernel(adj_ref, h1_ref, wgc_ref, bgc_ref, w2_ref, b2_ref,
                  out_ref, agg_ref, fused_ref, *, tm, tk):
    i = pl.program_id(0)
    k = pl.program_id(1)

    # Column (source-node) block of the VMEM-resident h1 -- no per-step re-DMA.
    col0 = pl.multiple_of(k * tk, tk)
    h1_col = h1_ref[pl.ds(col0, tk), :]                      # bf16 [tk, 64]

    # GraphConv 'add' aggregation: agg_i += sum_j A[i, j] * h1_j  (f32 accum).
    prod = jnp.dot(adj_ref[...], h1_col, preferred_element_type=jnp.float32)

    @pl.when(k == 0)
    def _():
        agg_ref[...] = prod                                   # no zero-init pass

    @pl.when(k > 0)
    def _():
        agg_ref[...] += prod

    @pl.when(k == pl.num_programs(1) - 1)
    def _():
        # Destination (row) block of h1, sliced from the same resident buffer.
        row0 = pl.multiple_of(i * tm, tm)
        h1_row = h1_ref[pl.ds(row0, tm), :]                   # bf16 [tm, 64]

        # Fused GraphConv: [agg, h1_row] @ [[W_rel],[W_root]] + b_rel -- one
        # K=128 matmul. Operand assembled in a bf16 scratch (no f32 concat).
        fused_ref[:, :_HID] = agg_ref[...].astype(jnp.bfloat16)
        fused_ref[:, _HID:] = h1_row
        h2 = jnp.tanh(jnp.dot(fused_ref[...], wgc_ref[...],
                              preferred_element_type=jnp.float32) + bgc_ref[...])
        h3 = jnp.tanh(jnp.dot(h2.astype(jnp.bfloat16), w2_ref[...],
                              preferred_element_type=jnp.float32) + b2_ref[...])

        # NormalParamExtractor as one lane-dense [tm, 16] store:
        # cols 0:8 = loc, cols 8:16 = clamp(softplus(x + log(e-1)), 1e-4).
        scale_all = jnp.maximum(jax.nn.softplus(h3 + _SOFTPLUS_INV_1), _SCALE_LB)
        col = jax.lax.broadcasted_iota(jnp.int32, h3.shape, 1)
        out_ref[...] = jnp.where(col < _OUT // 2, h3, scale_all)


def init_params(key):
    ks = jax.random.split(key, 5)
    s = 0.1
    w1 = s * jax.random.normal(ks[0], (_IN_DIM, _HID), jnp.float32)
    w1 = jnp.zeros((_IN_PAD, _HID), jnp.float32).at[:_IN_DIM].set(w1)  # pad 27->32
    w_rel = s * jax.random.normal(ks[2], (_HID, _HID), jnp.float32)
    w_root = s * jax.random.normal(ks[3], (_HID, _HID), jnp.float32)
    w_gc = jnp.concatenate([w_rel, w_root], axis=0)  # fused K=128 GraphConv weight
    w2 = s * jax.random.normal(ks[4], (_HID, _OUT), jnp.float32)
    return {
        # matmul weights stored already transposed + bf16; biases stay f32
        "w1": w1.astype(jnp.bfloat16),
        "b1": s * jax.random.normal(ks[1], (1, _HID), jnp.float32),
        "w_gc": w_gc.astype(jnp.bfloat16),
        "b_gc": jnp.zeros((1, _HID), jnp.float32),
        "w2": w2.astype(jnp.bfloat16),
        "b2": jnp.zeros((1, _OUT), jnp.float32),
    }


def _round_up(v, m):
    return ((v + m - 1) // m) * m


def _cdiv(a, b):
    return -(-a // b)


def _choose_tiling(n, tm, tk):
    """Independent row/col padding with rebalanced tiles (minimal padding waste)."""
    n_row_min = _round_up(max(n, 16), 16)     # bf16 sublane packing granularity
    n_col_min = _round_up(max(n, 128), 128)   # lane granularity

    n_i = _cdiv(n_row_min, tm)
    if n_i == 1 and n_row_min >= 512:
        n_i = 2                               # v7x megacore: >= 2 row blocks
    tm_eff = _round_up(_cdiv(n_row_min, n_i), 16)
    n_row_pad = n_i * tm_eff

    n_k = _cdiv(n_col_min, tk)
    tk_eff = _round_up(_cdiv(n_col_min, n_k), 128)
    n_col_pad = n_k * tk_eff
    return tm_eff, tk_eff, n_row_pad, n_col_pad


def single_node_actor_forward(x, edge_index, params, *, tm=1024, tk=2048):
    """x: [N, 27] float32, edge_index: [2, E] int32 (row 0 = source, row 1 = target)."""
    n = x.shape[0]
    tm_eff, tk_eff, n_row_pad, n_col_pad = _choose_tiling(n, tm, tk)
    n_h1 = max(n_row_pad, n_col_pad)          # h1 covers both row & column roles

    # ---- Stage 0 (wrapper): padded inputs --------------------------------
    x_pad = (jnp.zeros((n_h1, _IN_PAD), jnp.bfloat16)
             .at[:n, :_IN_DIM].set(x.astype(jnp.bfloat16)))

    # Dense adjacency, A[dst, src] += 1 (source_to_target flow), built directly
    # in bf16: exact for edge multiplicities < 256, no f32 materialize + cast.
    src, dst = edge_index[0], edge_index[1]
    adj = jnp.zeros((n_row_pad, n_col_pad), jnp.bfloat16).at[dst, src].add(1.0)
    # TODO(synk): for large sparse graphs, replace the dense adjacency with a
    # scalar-prefetched CSR/edge-list gather so HBM traffic is O(E*64), not O(N^2).

    # ---- Stage 1: h1 = x @ W1^T + b1 (row-tiled) --------------------------
    th = n_h1
    for cand in (2048, 1024, 512, 256, 128, 64, 32, 16):
        if n_h1 % cand == 0:
            th = cand
            break
    h1 = pl.pallas_call(
        _h1_kernel,
        out_shape=jax.ShapeDtypeStruct((n_h1, _HID), jnp.bfloat16),
        grid_spec=pltpu.PrefetchScalarGridSpec(
            num_scalar_prefetch=0,
            grid=(n_h1 // th,),
            in_specs=[
                pl.BlockSpec((th, _IN_PAD), lambda i: (i, 0)),
                pl.BlockSpec((_IN_PAD, _HID), lambda i: (0, 0)),
                pl.BlockSpec((1, _HID), lambda i: (0, 0)),
            ],
            out_specs=pl.BlockSpec((th, _HID), lambda i: (i, 0)),
        ),
        compiler_params=pltpu.CompilerParams(dimension_semantics=("parallel",)),
    )(x_pad, params["w1"], params["b1"])

    # ---- Stage 2: GraphConv + Tanh + Linear + Tanh + NormalParamExtractor -
    grid = (n_row_pad // tm_eff, n_col_pad // tk_eff)
    full = lambda shape: pl.BlockSpec(shape, lambda i, k: (0, 0))

    # Explicit VMEM budget (adjacency tiles double-buffered, h1 resident).
    vmem_need = (2 * tm_eff * tk_eff * 2          # adjacency stream (x2 buffers)
                 + 2 * n_h1 * _HID * 2            # resident h1 (conservative x2)
                 + tm_eff * _HID * 4              # f32 accumulator
                 + tm_eff * 2 * _HID * 2          # fused bf16 scratch
                 + 2 * tm_eff * _OUT * 4          # output blocks
                 + (1 << 20))                     # weights + headroom
    vmem_limit = int(min(max(vmem_need, 32 << 20), 48 << 20))

    out = pl.pallas_call(
        functools.partial(_actor_kernel, tm=tm_eff, tk=tk_eff),
        out_shape=jax.ShapeDtypeStruct((n_row_pad, _OUT), jnp.float32),
        grid_spec=pltpu.PrefetchScalarGridSpec(
            num_scalar_prefetch=0,
            grid=grid,
            in_specs=[
                pl.BlockSpec((tm_eff, tk_eff), lambda i, k: (i, k)),   # adj tile
                pl.BlockSpec((n_h1, _HID), lambda i, k: (0, 0)),       # h1 (resident)
                full((2 * _HID, _HID)),    # w_gc (stacked [W_rel; W_root])
                full((1, _HID)),           # b_gc
                full((_HID, _OUT)),        # w2
                full((1, _OUT)),           # b2
            ],
            out_specs=pl.BlockSpec((tm_eff, _OUT), lambda i, k: (i, 0)),
            scratch_shapes=[
                pltpu.VMEM((tm_eff, _HID), jnp.float32),      # agg accumulator
                pltpu.VMEM((tm_eff, 2 * _HID), jnp.bfloat16),  # fused GraphConv operand
            ],
        ),
        compiler_params=pltpu.CompilerParams(
            dimension_semantics=("parallel", "arbitrary"),
            vmem_limit_bytes=vmem_limit),
    )(adj, h1, params["w_gc"], params["b_gc"], params["w2"], params["b2"])

    out = out[:n]
    loc_t = out[:, : _OUT // 2].T
    scale_t = out[:, _OUT // 2:].T
    if n == 1:
        loc_t = jnp.squeeze(loc_t, axis=-1)
        scale_t = jnp.squeeze(scale_t, axis=-1)
    return loc_t, scale_t


def _reference(x, edge_index, params):
    """Pure-JAX f32 reference on the same (bf16-rounded) parameters."""
    n = x.shape[0]
    adj = jnp.zeros((n, n), jnp.float32).at[edge_index[1], edge_index[0]].add(1.0)
    w1 = params["w1"].astype(jnp.float32)
    w_rel = params["w_gc"].astype(jnp.float32)[:_HID]
    w_root = params["w_gc"].astype(jnp.float32)[_HID:]
    w2 = params["w2"].astype(jnp.float32)
    x_pad = jnp.zeros((n, _IN_PAD), jnp.float32).at[:, :_IN_DIM].set(x)
    h1 = x_pad @ w1 + params["b1"]
    h2 = jnp.tanh((adj @ h1) @ w_rel + params["b_gc"] + h1 @ w_root)
    h3 = jnp.tanh(h2 @ w2 + params["b2"])
    loc = h3[:, : _OUT // 2]
    scale = jnp.maximum(jax.nn.softplus(h3[:, _OUT // 2:] + _SOFTPLUS_INV_1), _SCALE_LB)
    return loc.T, scale.T


if __name__ == "__main__":
    key = jax.random.PRNGKey(0)
    k_param, k_x, k_e, k_x2, k_e2 = jax.random.split(key, 5)
    params = init_params(k_param)

    # Small graph (single-tile path): 8 nodes, 12 directed edges, 27 features.
    N, E = 8, 12
    x = jax.random.normal(k_x, (N, _IN_DIM), jnp.float32)
    edge_index = jax.random.randint(k_e, (2, E), 0, N, jnp.int32)
    loc, scale = single_node_actor_forward(x, edge_index, params)
    jax.block_until_ready((loc, scale))
    loc_r, scale_r = _reference(x, edge_index, params)
    assert loc.shape == (_OUT // 2, N) and scale.shape == (_OUT // 2, N)
    assert jnp.allclose(loc, loc_r, atol=2e-2, rtol=2e-2)
    assert jnp.allclose(scale, scale_r, atol=2e-2, rtol=2e-2)

    # Medium graph exercising multi-block rows + the k-reduction accumulator
    # path (grid (3, 2) with tm=64 -> tm_eff=64, tk=128 -> tk_eff=128).
    N2, E2 = 160, 480
    x2 = jax.random.normal(k_x2, (N2, _IN_DIM), jnp.float32)
    edge_index2 = jax.random.randint(k_e2, (2, E2), 0, N2, jnp.int32)
    loc2, scale2 = single_node_actor_forward(x2, edge_index2, params, tm=64, tk=128)
    jax.block_until_ready((loc2, scale2))
    loc2_r, scale2_r = _reference(x2, edge_index2, params)
    assert jnp.allclose(loc2, loc2_r, atol=2e-2, rtol=2e-2)
    assert jnp.allclose(scale2, scale2_r, atol=2e-2, rtol=2e-2)

    print("KERNEL_OK")
</pallas_src>

<mosaic_0001>
module attributes {stable_mosaic.version = 11 : i64} {
  func.func @_h1_kernel(%arg0: i32, %arg1: memref<128x32xbf16, #tpu.memory_space<vmem>>, %arg2: memref<32x64xbf16, #tpu.memory_space<vmem>>, %arg3: memref<1x64xf32, #tpu.memory_space<vmem>>, %arg4: memref<128x64xbf16, #tpu.memory_space<vmem>>) attributes {dimension_semantics = [#tpu.dimension_semantics<parallel>], iteration_bounds = array<i64: 1>, scalar_prefetch = 0 : i64, scratch_operands = 0 : i64, tpu.core_type = #tpu.core_type<tc>, window_params = [{transform_indices = @transform_0, window_bounds = array<i64: 128, 32>}, {pipeline_mode = #tpu.pipeline_mode<synchronous>, transform_indices = @transform_1, window_bounds = array<i64: 32, 64>}, {pipeline_mode = #tpu.pipeline_mode<synchronous>, transform_indices = @transform_2, window_bounds = array<i64: 1, 64>}, {transform_indices = @transform_3, window_bounds = array<i64: 128, 64>}]} {
    %c0 = arith.constant 0 : index
    %c0_0 = arith.constant 0 : index
    %0 = vector.load %arg1[%c0, %c0_0] : memref<128x32xbf16, #tpu.memory_space<vmem>>, vector<128x32xbf16>
    %c0_1 = arith.constant 0 : index
    %c0_2 = arith.constant 0 : index
    %1 = vector.load %arg2[%c0_1, %c0_2] : memref<32x64xbf16, #tpu.memory_space<vmem>>, vector<32x64xbf16>
    %cst = arith.constant dense<0.000000e+00> : vector<128x64xf32>
    %2 = tpu.matmul %0, %1, %cst {dimension_numbers = #tpu.dot_dimension_numbers<[1], [0], [0], [1], [0, 0, 1, 1], [], []>} : vector<128x32xbf16>, vector<32x64xbf16>, vector<128x64xf32> -> vector<128x64xf32>
    %c0_3 = arith.constant 0 : index
    %c0_4 = arith.constant 0 : index
    %3 = vector.load %arg3[%c0_3, %c0_4] : memref<1x64xf32, #tpu.memory_space<vmem>>, vector<1x64xf32>
    %4 = vector.broadcast %3 : vector<1x64xf32> to vector<128x64xf32>
    %5 = arith.addf %2, %4 : vector<128x64xf32>
    %6 = arith.truncf %5 : vector<128x64xf32> to vector<128x64xbf16>
    %c0_5 = arith.constant 0 : index
    %c0_6 = arith.constant 0 : index
    %7 = vector.load %arg4[%c0_5, %c0_6] : memref<128x64xbf16, #tpu.memory_space<vmem>>, vector<128x64xbf16>
    tpu.vector_store %arg4[%c0_5, %c0_6], %6 {strides = array<i32>} : memref<128x64xbf16, #tpu.memory_space<vmem>>, vector<128x64xbf16>,
    return
  }
  func.func @transform_0(%arg0: i32) -> (i32, i32) {
    %c0_i32 = arith.constant 0 : i32
    %c0_i32_0 = arith.constant 0 : i32
    return %arg0, %c0_i32 : i32, i32
  }
  func.func @transform_1(%arg0: i32) -> (i32, i32) {
    %c0_i32 = arith.constant 0 : i32
    %c0_i32_0 = arith.constant 0 : i32
    %c0_i32_1 = arith.constant 0 : i32
    return %c0_i32, %c0_i32_0 : i32, i32
  }
  func.func @transform_2(%arg0: i32) -> (i32, i32) {
    %c0_i32 = arith.constant 0 : i32
    %c0_i32_0 = arith.constant 0 : i32
    %c0_i32_1 = arith.constant 0 : i32
    return %c0_i32, %c0_i32_0 : i32, i32
  }
  func.func @transform_3(%arg0: i32) -> (i32, i32) {
    %c0_i32 = arith.constant 0 : i32
    %c0_i32_0 = arith.constant 0 : i32
    return %arg0, %c0_i32 : i32, i32
  }
}

</mosaic_0001>

<llo_original>
// kernel: tpu_custom_call.1
$region0: #{tpu_custom_call.1}
  #allocation0 [shape = 'u32[]', space=smem, size = 0x4, offset = 0x4, fixed_abs, tag = 'smem constant byte address 0x4 - core index']
  #allocation1 [shape = 'u32[144,128]{1,0:T(1,128)}', space=vmem, size = 0x12000, scoped, tag = 'internal scratch']
  %s0 = inlined_call_operand.vmem [shape: bf16[128,32], index: 0, kind: input, shape index: {}]
  %s1 = inlined_call_operand.vmem [shape: bf16[32,64], index: 1, kind: input, shape index: {}]
  %s2 = inlined_call_operand.vmem [shape: f32[1,64], index: 2, kind: input, shape index: {}]
  %s3 = inlined_call_operand.vmem [shape: bf16[128,64], index: 3, kind: output, shape index: {}]
  %s4 = sld [smem:[#allocation0]]
  $region22: #{tpu_custom_call.1} parent=0
    _
  %s6 = ssub.s32 1, %s4
  %s7 = scalar_select 0, %s6, %s4
  // Predicated region
  $region2: #{tpu_custom_call.1} parent=0 // pred_check
    _
  $region3: #{tpu_custom_call.1} parent=0 // pred_check_branch
    %9 = sbr.rel (0) target = $region5
  $region4: #{tpu_custom_call.1} parent=0 // pred_region
    _
  $region5: #{tpu_custom_call.1} parent=0 // pred_fallthru
    _
  // Predicated region
  $region6: #{tpu_custom_call.1} parent=0 // pred_check
    _
  $region7: #{tpu_custom_call.1} parent=0 // pred_check_branch
    %11 = sbr.rel (0) target = $region9
  $region8: #{tpu_custom_call.1} parent=0 // pred_region
    _
  $region9: #{tpu_custom_call.1} parent=0 // pred_fallthru
    _
  // Predicated region
  $region10: #{tpu_custom_call.1} parent=0 // pred_check
    _
  $region11: #{tpu_custom_call.1} parent=0 // pred_check_branch
    %13 = sbr.rel (0) target = $region13
  $region12: #{tpu_custom_call.1} parent=0 // pred_region
    _
  $region13: #{tpu_custom_call.1} parent=0 // pred_fallthru
    _
  %v15 = vld [vmem:[%s0] sm:$0xf]
  %v16 = vld [vmem:[%s0 + $0x4] sm:$0xf]
  %v17 = vld [vmem:[%s0 + $0x8] sm:$0xf]
  %v18 = vld [vmem:[%s0 + $0xc] sm:$0xf]
  %v19 = vld [vmem:[%s0 + $0x10] sm:$0xf]
  %v20 = vld [vmem:[%s0 + $0x14] sm:$0xf]
  %v21 = vld [vmem:[%s0 + $0x18] sm:$0xf]
  %v22 = vld [vmem:[%s0 + $0x1c] sm:$0xf]
  %v23 = vld [vmem:[%s0 + $0x20] sm:$0xf]
  %v24 = vld [vmem:[%s0 + $0x24] sm:$0xf]
  %v25 = vld [vmem:[%s0 + $0x28] sm:$0xf]
  %v26 = vld [vmem:[%s0 + $0x2c] sm:$0xf]
  %v27 = vld [vmem:[%s0 + $0x30] sm:$0xf]
  %v28 = vld [vmem:[%s0 + $0x34] sm:$0xf]
  %v29 = vld [vmem:[%s0 + $0x38] sm:$0xf]
  %v30 = vld [vmem:[%s0 + $0x3c] sm:$0xf]
  %v31 = vld [vmem:[%s1] sm:$0xf]
  %v32 = vld [vmem:[%s1 + $0x4] sm:$0xf]
  %v33 = vld [vmem:[%s1 + $0x8] sm:$0xf]
  %v34 = vld [vmem:[%s1 + $0xc] sm:$0xf]
  %v35 = vld [vmem:[%s2] sm:$0x1]
  %v37 = vlaneseq
  %v38 = vshrl.u32 %v37, 7
  %v39 = vsub.s32 0, %v38
  %v40 = vrot.slane %v35, %v39
  %v58 = vunpack.c.l.b16 %v15
  %v59 = vunpack.c.l.b16 %v16
  %v60 = vunpack.c.l.b16 %v17
  %v61 = vunpack.c.l.b16 %v18
  %v62 = vunpack.c.l.b16 %v19
  %v63 = vunpack.c.l.b16 %v20
  %v64 = vunpack.c.l.b16 %v21
  %v65 = vunpack.c.l.b16 %v22
  %v66 = vunpack.c.l.b16 %v23
  %v67 = vunpack.c.l.b16 %v24
  %v68 = vunpack.c.l.b16 %v25
  %v69 = vunpack.c.l.b16 %v26
  %v70 = vunpack.c.l.b16 %v27
  %v71 = vunpack.c.l.b16 %v28
  %v72 = vunpack.c.l.b16 %v29
  %v73 = vunpack.c.l.b16 %v30
  %v74 = vpack.c.b16 %v59, %v58
  %v75 = vpack.c.b16 %v61, %v60
  %v76 = vpack.c.b16 %v63, %v62
  %v77 = vpack.c.b16 %v65, %v64
  %v78 = vpack.c.b16 %v67, %v66
  %v79 = vpack.c.b16 %v69, %v68
  %v80 = vpack.c.b16 %v71, %v70
  %v81 = vpack.c.b16 %v73, %v72
  %v86 = vunpack.c.l.b16 %v31
  %v87 = vunpack.c.l.b16 %v32
  %v88 = vunpack.c.l.b16 %v33
  %v89 = vunpack.c.l.b16 %v34
  %v90 = vpack.c.b16 %v87, %v86
  %v91 = vpack.c.b16 %v89, %v88
  %vm94 = vcmask 261120
  %v96 = vsel %vm94, %v74, 0
  %v99 = vsel %vm94, %v75, 0
  %v102 = vsel %vm94, %v76, 0
  %v105 = vsel %vm94, %v77, 0
  %v108 = vsel %vm94, %v78, 0
  %v111 = vsel %vm94, %v79, 0
  %v114 = vsel %vm94, %v80, 0
  %v117 = vsel %vm94, %v81, 0
  %119 = vmatprep.subr.bf16.mxu0 0
  %120 = vmatpush1.bf16.msra.mxu0 %v90
  %121 = vmatprep.subr.bf16.mxu0 0
  %122 = vmatpush1.bf16.msra.mxu0 %v91
  %123 = vmatprep.subr.bf16.mxu0 0
  %124 = vmatpush1.bf16.msra.mxu0 0
  %125 = vmatprep.subr.bf16.mxu0 0
  %126 = vmatpush1.bf16.msra.mxu0 0
  %127 = vmatprep.subr.bf16.mxu0 0
  %128 = vmatpush1.bf16.msra.mxu0 0
  %129 = vmatprep.subr.bf16.mxu0 0
  %130 = vmatpush1.bf16.msra.mxu0 0
  %131 = vmatprep.subr.bf16.mxu0 0
  %132 = vmatpush1.bf16.msra.mxu0 0
  %133 = vmatprep.subr.bf16.mxu0 0
  %134 = vmatpush1.bf16.msra.mxu0 0
  %135 = vmatprep.subr.bf16.mxu0 0
  %136 = vmatpush1.bf16.msra.mxu0 0
  %137 = vmatprep.subr.bf16.mxu0 0
  %138 = vmatpush1.bf16.msra.mxu0 0
  %139 = vmatprep.subr.bf16.mxu0 0
  %140 = vmatpush1.bf16.msra.mxu0 0
  %141 = vmatprep.subr.bf16.mxu0 0
  %142 = vmatpush1.bf16.msra.mxu0 0
  %143 = vmatprep.subr.bf16.mxu0 0
  %144 = vmatpush1.bf16.msra.mxu0 0
  %145 = vmatprep.subr.bf16.mxu0 0
  %146 = vmatpush1.bf16.msra.mxu0 0
  %147 = vmatprep.subr.bf16.mxu0 0
  %148 = vmatpush1.bf16.msra.mxu0 0
  %149 = vmatprep.subr.bf16.mxu0 0
  %150 = vmatpush1.bf16.msra.mxu0 0
  %151 = vmatprep.mubr.bf16.mxu0 0
  %152 = vmatmul.mubr.bf16.gmra.mrb[0].mxu0 %v96
  %v153 = vpop.f32.mrb[0].mxu0
  %v154 = vadd.f32 %v40, %v153
  %v155 = vpop.f32.mrb[0].mxu0
  %v156 = vpop.f32.mrb[0].mxu0
  %v157 = vadd.f32 %v40, %v156
  %v158 = vpop.f32.mrb[0].mxu0
  %159 = vmatprep.mubr.bf16.mxu0 0
  %160 = vmatmul.mubr.bf16.gmra.mrb[0].mxu0 %v99
  %v161 = vpop.f32.mrb[0].mxu0
  %v162 = vadd.f32 %v40, %v161
  %v163 = vpop.f32.mrb[0].mxu0
  %v164 = vpop.f32.mrb[0].mxu0
  %v165 = vadd.f32 %v40, %v164
  %v166 = vpop.f32.mrb[0].mxu0
  %167 = vmatprep.mubr.bf16.mxu0 0
  %168 = vmatmul.mubr.bf16.gmra.mrb[0].mxu0 %v102
  %v169 = vpop.f32.mrb[0].mxu0
  %v170 = vadd.f32 %v40, %v169
  %v171 = vpop.f32.mrb[0].mxu0
  %v172 = vpop.f32.mrb[0].mxu0
  %v173 = vadd.f32 %v40, %v172
  %v174 = vpop.f32.mrb[0].mxu0
  %175 = vmatprep.mubr.bf16.mxu0 0
  %176 = vmatmul.mubr.bf16.gmra.mrb[0].mxu0 %v105
  %v177 = vpop.f32.mrb[0].mxu0
  %v178 = vadd.f32 %v40, %v177
  %v179 = vpop.f32.mrb[0].mxu0
  %v180 = vpop.f32.mrb[0].mxu0
  %v181 = vadd.f32 %v40, %v180
  %v182 = vpop.f32.mrb[0].mxu0
  %183 = vmatprep.mubr.bf16.mxu0 0
  %184 = vmatmul.mubr.bf16.gmra.mrb[0].mxu0 %v108
  %v185 = vpop.f32.mrb[0].mxu0
  %v186 = vadd.f32 %v40, %v185
  %v187 = vpop.f32.mrb[0].mxu0
  %v188 = vpop.f32.mrb[0].mxu0
  %v189 = vadd.f32 %v40, %v188
  %v190 = vpop.f32.mrb[0].mxu0
  %191 = vmatprep.mubr.bf16.mxu0 0
  %192 = vmatmul.mubr.bf16.gmra.mrb[0].mxu0 %v111
  %v193 = vpop.f32.mrb[0].mxu0
  %v194 = vadd.f32 %v40, %v193
  %v195 = vpop.f32.mrb[0].mxu0
  %v196 = vpop.f32.mrb[0].mxu0
  %v197 = vadd.f32 %v40, %v196
  %v198 = vpop.f32.mrb[0].mxu0
  %199 = vmatprep.mubr.bf16.mxu0 0
  %200 = vmatmul.mubr.bf16.gmra.mrb[0].mxu0 %v114
  %v201 = vpop.f32.mrb[0].mxu0
  %v202 = vadd.f32 %v40, %v201
  %v203 = vpop.f32.mrb[0].mxu0
  %v204 = vpop.f32.mrb[0].mxu0
  %v205 = vadd.f32 %v40, %v204
  %v206 = vpop.f32.mrb[0].mxu0
  %207 = vmatprep.mubr.bf16.mxu0 0
  %208 = vmatmul.mubr.bf16.gmra.mrb[0].mxu0 %v117
  %v209 = vpop.f32.mrb[0].mxu0
  %v210 = vadd.f32 %v40, %v209
  %v211 = vpop.f32.mrb[0].mxu0
  %v212 = vpop.f32.mrb[0].mxu0
  %v213 = vadd.f32 %v40, %v212
  %v214 = vpop.f32.mrb[0].mxu0
  %215 = vdwg.mxu0
  %v216 = vpack.c.bf16 %v157, %v154
  %v217 = vpack.c.bf16 %v165, %v162
  %v218 = vpack.c.bf16 %v173, %v170
  %v219 = vpack.c.bf16 %v181, %v178
  %v220 = vpack.c.bf16 %v189, %v186
  %v221 = vpack.c.bf16 %v197, %v194
  %v222 = vpack.c.bf16 %v205, %v202
  %v223 = vpack.c.bf16 %v213, %v210
  %v232 = vunpack.c.l.b16 %v216
  %v233 = vunpack.c.h.b16 %v216
  %v234 = vunpack.c.l.b16 %v217
  %v235 = vunpack.c.h.b16 %v217
  %v236 = vunpack.c.l.b16 %v218
  %v237 = vunpack.c.h.b16 %v218
  %v238 = vunpack.c.l.b16 %v219
  %v239 = vunpack.c.h.b16 %v219
  %v240 = vunpack.c.l.b16 %v220
  %v241 = vunpack.c.h.b16 %v220
  %v242 = vunpack.c.l.b16 %v221
  %v243 = vunpack.c.h.b16 %v221
  %v244 = vunpack.c.l.b16 %v222
  %v245 = vunpack.c.h.b16 %v222
  %v246 = vunpack.c.l.b16 %v223
  %v247 = vunpack.c.h.b16 %v223
  %v248 = vpack.c.b16 %v232, %v232
  %v249 = vpack.c.b16 %v233, %v233
  %v250 = vpack.c.b16 %v234, %v234
  %v251 = vpack.c.b16 %v235, %v235
  %v252 = vpack.c.b16 %v236, %v236
  %v253 = vpack.c.b16 %v237, %v237
  %v254 = vpack.c.b16 %v238, %v238
  %v255 = vpack.c.b16 %v239, %v239
  %v256 = vpack.c.b16 %v240, %v240
  %v257 = vpack.c.b16 %v241, %v241
  %v258 = vpack.c.b16 %v242, %v242
  %v259 = vpack.c.b16 %v243, %v243
  %v260 = vpack.c.b16 %v244, %v244
  %v261 = vpack.c.b16 %v245, %v245
  %v262 = vpack.c.b16 %v246, %v246
  %v263 = vpack.c.b16 %v247, %v247
  %vm280 = vcmask 519168
  %281 = vst.msk [vmem:[%s3] sm:$0xf] %vm280, %v248
  %282 = vst.msk [vmem:[%s3 + $0x4] sm:$0xf] %vm280, %v249
  %283 = vst.msk [vmem:[%s3 + $0x8] sm:$0xf] %vm280, %v250
  %284 = vst.msk [vmem:[%s3 + $0xc] sm:$0xf] %vm280, %v251
  %285 = vst.msk [vmem:[%s3 + $0x10] sm:$0xf] %vm280, %v252
  %286 = vst.msk [vmem:[%s3 + $0x14] sm:$0xf] %vm280, %v253
  %287 = vst.msk [vmem:[%s3 + $0x18] sm:$0xf] %vm280, %v254
  %288 = vst.msk [vmem:[%s3 + $0x1c] sm:$0xf] %vm280, %v255
  %289 = vst.msk [vmem:[%s3 + $0x20] sm:$0xf] %vm280, %v256
  %290 = vst.msk [vmem:[%s3 + $0x24] sm:$0xf] %vm280, %v257
  %291 = vst.msk [vmem:[%s3 + $0x28] sm:$0xf] %vm280, %v258
  %292 = vst.msk [vmem:[%s3 + $0x2c] sm:$0xf] %vm280, %v259
  %293 = vst.msk [vmem:[%s3 + $0x30] sm:$0xf] %vm280, %v260
  %294 = vst.msk [vmem:[%s3 + $0x34] sm:$0xf] %vm280, %v261
  %295 = vst.msk [vmem:[%s3 + $0x38] sm:$0xf] %vm280, %v262
  %296 = vst.msk [vmem:[%s3 + $0x3c] sm:$0xf] %vm280, %v263
  // Predicated region
  $region14: #{tpu_custom_call.1} parent=0 // pred_check
    _
  $region15: #{tpu_custom_call.1} parent=0 // pred_check_branch
    %298 = sbr.rel (0) target = $region17
  $region16: #{tpu_custom_call.1} parent=0 // pred_region
    _
  $region17: #{tpu_custom_call.1} parent=0 // pred_fallthru
    _
  // Predicated region
  $region18: #{tpu_custom_call.1} parent=0 // pred_check
    _
  $region19: #{tpu_custom_call.1} parent=0 // pred_check_branch
    %300 = sbr.rel (0) target = $region21
  $region20: #{tpu_custom_call.1} parent=0 // pred_region
    _
  $region21: #{tpu_custom_call.1} parent=0 // pred_fallthru
    _

</llo_original>
